<compile_context>
chip_gen: v7x
topology: tpu7x:2x2x1
jax: 0.10.0
libtpu: 0.0.40
codegen_flags: <defaults>
</compile_context>

<pallas_src>
import math

import jax
import jax.numpy as jnp
from jax import lax
from jax.experimental import pallas as pl
from jax.experimental.pallas import tpu as pltpu

_INT32_MAX = 2147483647
_INT32_LO = -2147483647          # INT32_MIN + 1 (no finite float maps to INT32_MIN)


def _make_kernel(k, two_tailed, lo_init, hi_init, n_iters, key_shift,
                 n_real_lanes, n_lanes, use_mxu_count):
    """All arguments are Python scalars (inlined as jaxpr literals)."""
    kf = float(k)

    def kernel(x_ref, o_ref):
        x = x_ref[...]                                   # (rt, Lp), original dtype
        xf = x.astype(jnp.float32)
        a = jnp.abs(xf) if two_tailed else xf            # quantity torch sorts on

        # Order-preserving int32 key of float32 (involution; handles negatives).
        bits = lax.bitcast_convert_type(a, jnp.int32)
        key = jnp.where(bits >= 0, bits, bits ^ 0x7FFFFFFF)
        if key_shift:                                    # bf16-derived f32: low 16 bits are 0
            key = key >> key_shift
        if n_lanes != n_real_lanes:
            # Lane-padding sentinels: key == lo_init is never counted (every mid > lo while
            # lo < hi), so padded lanes cannot perturb the bisection.
            lane = lax.broadcasted_iota(jnp.int32, key.shape, 1)
            key = jnp.where(lane < n_real_lanes, key, lo_init)

        rt = key.shape[0]
        lo = jnp.full((rt, 1), lo_init, dtype=jnp.int32)
        hi = jnp.full((rt, 1), hi_init, dtype=jnp.int32)

        if use_mxu_count:
            # Hoisted out of the loop (JAX does not CSE broadcast_in_dim).
            ones = jnp.ones((n_lanes, 128), jnp.bfloat16)

        def count_ge(mid):
            m = key >= mid
            if use_mxu_count:
                # MXU count: 1.0 exact in bf16, f32 accumulation exact for L <= 2**24.
                cnt = jnp.dot(m.astype(jnp.bfloat16), ones,
                              preferred_element_type=jnp.float32)
                return cnt[:, 0:1]
            return jnp.sum(m.astype(jnp.float32), axis=-1, keepdims=True)

        # Bisection for the largest T with #{key >= T} >= k == key of torch's
        # sorted(a)[..., L-k] per row.
        def body(_, carry):
            lo, hi = carry
            xr = lo ^ hi
            mid = (lo & hi) + (xr >> 1) + (xr & 1)       # ceil((lo+hi)/2), overflow-safe
            take = count_ge(mid) >= kf
            return jnp.where(take, mid, lo), jnp.where(take, hi, mid - 1)

        lo, _ = lax.fori_loop(0, n_iters, body, (lo, hi))

        if two_tailed:
            # Key-space mask (monotone bijection on |x|): frees `a` before the loop and
            # skips the bitcast/broadcast of a float threshold.
            o_ref[...] = jnp.where(key >= lo, x, 0).astype(o_ref.dtype)
        else:
            # One-tailed keeps the float compare to preserve -0.0 >= 0.0 tie semantics.
            thr_bits = jnp.where(lo >= 0, lo, lo ^ 0x7FFFFFFF)
            thr = lax.bitcast_convert_type(thr_bits, jnp.float32)
            o_ref[...] = jnp.where(a >= thr, x, 0).astype(o_ref.dtype)

    return kernel


def _vmem_capacity_bytes():
    try:
        info = pltpu.get_tpu_info()
        return int(getattr(info, "vmem_capacity_bytes", 64 << 20))
    except Exception:
        return 64 << 20            # conservative default (v7x per-core VMEM)


def sparsify_pallas(x, sparsity, dim=(2, 3), two_tailed=True):
    """Pallas equivalent of Sparsifier(sparsity, dim, two_tailed).forward(x)."""
    if sparsity == 0.0:
        return x
    if isinstance(dim, int):
        dim = (dim,)
    dim = tuple(sorted(dim))
    shape = x.shape
    assert max(dim) < len(shape), "sparsify dim out of range"

    length = 1
    for d in dim:
        length *= shape[d]
    rows = 1
    for i, s in enumerate(shape):
        if i not in dim:
            rows *= s

    n_sparse = length - math.ceil(sparsity * length)     # kept elements per row
    assert 1 <= n_sparse <= length, "degenerate sparsity for this shape"
    assert length <= (1 << 24), "f32 count is exact only for L <= 2**24"

    # Same memory-order reshape torch performs via x.reshape(sorted_shape).
    t = x.reshape(rows, length)

    # --- lane padding: lane-dense stores + full-vreg compares -----------------
    lanes = max(128, ((length + 127) // 128) * 128)
    if lanes != length:
        t = jnp.pad(t, ((0, 0), (0, lanes - length)))

    # --- bisection parameters (dtype / tail-mode dependent) -------------------
    use16 = two_tailed and x.dtype == jnp.bfloat16
    if use16:                       # bf16: only the upper 16 key bits are meaningful
        lo_init, hi_init, n_iters, key_shift = 0, 32767, 15, 16
    elif two_tailed:                # |x| -> keys are non-negative
        lo_init, hi_init, n_iters, key_shift = 0, _INT32_MAX, 31, 0
    else:
        lo_init, hi_init, n_iters, key_shift = _INT32_LO, _INT32_MAX, 32, 0

    use_mxu_count = lanes <= 16384  # keep the ones matrix under ~4 MiB of VMEM

    # --- row tiling (generation-aware VMEM budget) ----------------------------
    vmem_cap = _vmem_capacity_bytes()
    # ~4 MiB f32 tile on v5e/v6e (128 MiB VMEM), ~2 MiB on v7x (64 MiB VMEM).
    tile_budget = int(min(8 << 20, max(256 << 10, vmem_cap // 32)))
    rows8 = ((rows + 7) // 8) * 8
    per_row_f32 = lanes * 4
    row_tile = min(rows8, max(8, (tile_budget // per_row_f32) // 8 * 8))
    # Guarantee >= 2 grid blocks when possible so v7x's second TensorCore is used.
    if rows8 // row_tile < 2 and rows8 >= 16:
        row_tile = max(8, ((rows8 // 2) // 8) * 8)
    num_blocks = (rows8 + row_tile - 1) // row_tile
    rows_padded = num_blocks * row_tile
    if rows_padded != rows:
        # zero-padded rows converge to threshold 0 and write back zeros -> harmless
        t = jnp.pad(t, ((0, rows_padded - rows), (0, 0)))

    # TODO(synk): add a second ("arbitrary") lane-tile grid axis with partial counts for
    # very large sparsify dims; lanes are untiled here, so the 8-row floor can still exceed
    # VMEM when lanes alone approach the scoped limit (bites earliest on v7x).

    in_bytes = jnp.dtype(x.dtype).itemsize
    blk = row_tile * lanes
    need = 4 * blk * in_bytes                      # in + out blocks, double buffered
    need += blk * (4 + 4 + 2 + 4)                  # key(i32) + f32 temp + bf16 mask + slack
    if use_mxu_count:
        need += lanes * 128 * 2                    # ones matrix
    vmem_limit = int(min(max(need + (2 << 20), 16 << 20),
                         max(vmem_cap - (8 << 20), 16 << 20)))

    kern = _make_kernel(n_sparse, two_tailed, lo_init, hi_init, n_iters, key_shift,
                        length, lanes, use_mxu_count)

    out = pl.pallas_call(
        kern,
        out_shape=jax.ShapeDtypeStruct((rows_padded, lanes), x.dtype),
        grid_spec=pltpu.PrefetchScalarGridSpec(
            num_scalar_prefetch=0,
            grid=(num_blocks,),
            in_specs=[pl.BlockSpec((row_tile, lanes), lambda i: (i, 0))],
            out_specs=pl.BlockSpec((row_tile, lanes), lambda i: (i, 0)),
        ),
        compiler_params=pltpu.CompilerParams(
            dimension_semantics=("parallel",),
            vmem_limit_bytes=vmem_limit,
        ),
    )(t)

    if rows_padded != rows or lanes != length:
        out = out[:rows, :length]
    return out.reshape(shape)


def sparsify_ref(x, sparsity, dim=(2, 3), two_tailed=True):
    """Pure-JAX reference mirroring the torch code (sort-based)."""
    if isinstance(dim, int):
        dim = (dim,)
    dim = tuple(sorted(dim))
    shape = x.shape
    length = 1
    for d in dim:
        length *= shape[d]
    rows = 1
    for i, s in enumerate(shape):
        if i not in dim:
            rows *= s
    t = x.reshape(rows, length)
    a = jnp.abs(t) if two_tailed else t
    sorted_t = jnp.sort(a, axis=-1)
    n_sparse = length - math.ceil(sparsity * length)
    index = length - n_sparse
    values = sorted_t[:, index][:, None]
    mask = (a >= values).astype(x.dtype)
    return (t * mask).reshape(shape)


if __name__ == "__main__":
    key0 = jax.random.PRNGKey(0)
    x = jax.random.normal(key0, (2, 4, 16, 16), dtype=jnp.float32)

    # two-tailed (default module behavior)
    out = jax.block_until_ready(sparsify_pallas(x, 0.9, dim=(2, 3), two_tailed=True))
    ref = sparsify_ref(x, 0.9, dim=(2, 3), two_tailed=True)
    assert out.shape == x.shape and out.dtype == x.dtype
    assert jnp.allclose(out, ref, atol=1e-6), "mismatch vs reference (two-tailed)"

    # tie-heavy input exercises the '>=' duplicate-keeping semantics
    x2 = jnp.round(x * 2.0) / 2.0
    out2 = jax.block_until_ready(sparsify_pallas(x2, 0.75, dim=(2, 3), two_tailed=True))
    ref2 = sparsify_ref(x2, 0.75, dim=(2, 3), two_tailed=True)
    assert jnp.allclose(out2, ref2, atol=1e-6), "mismatch vs reference (ties)"

    # one-tailed path (signed values, negative keys, float-compare final mask)
    out3 = jax.block_until_ready(sparsify_pallas(x, 0.9, dim=(2, 3), two_tailed=False))
    ref3 = sparsify_ref(x, 0.9, dim=(2, 3), two_tailed=False)
    assert jnp.allclose(out3, ref3, atol=1e-6), "mismatch vs reference (one-tailed)"

    # single sparsify dim (int), length 16 -> exercises lane padding + sentinel keys
    out4 = jax.block_until_ready(sparsify_pallas(x, 0.5, dim=3, two_tailed=True))
    ref4 = sparsify_ref(x, 0.5, dim=3, two_tailed=True)
    assert jnp.allclose(out4, ref4, atol=1e-6), "mismatch vs reference (lane padding)"

    # bf16 input -> 16-bit key fast path (15 bisection iterations)
    xb = x.astype(jnp.bfloat16)
    out5 = jax.block_until_ready(sparsify_pallas(xb, 0.9, dim=(2, 3), two_tailed=True))
    ref5 = sparsify_ref(xb, 0.9, dim=(2, 3), two_tailed=True)
    assert out5.dtype == jnp.bfloat16
    assert jnp.array_equal(out5, ref5), "mismatch vs reference (bf16 fast path)"

    print("KERNEL_OK")
</pallas_src>

<mosaic_0001>
module attributes {stable_mosaic.version = 11 : i64} {
  func.func @kernel(%arg0: i32, %arg1: memref<8x256xf32, #tpu.memory_space<vmem>>, %arg2: memref<8x256xf32, #tpu.memory_space<vmem>>) attributes {dimension_semantics = [#tpu.dimension_semantics<parallel>], iteration_bounds = array<i64: 1>, scalar_prefetch = 0 : i64, scratch_operands = 0 : i64, tpu.core_type = #tpu.core_type<tc>, window_params = [{transform_indices = @transform_0, window_bounds = array<i64: 8, 256>}, {transform_indices = @transform_1, window_bounds = array<i64: 8, 256>}]} {
    %c0 = arith.constant 0 : index
    %c0_0 = arith.constant 0 : index
    %0 = vector.load %arg1[%c0, %c0_0] : memref<8x256xf32, #tpu.memory_space<vmem>>, vector<8x256xf32>
    %1 = math.absf %0 : vector<8x256xf32>
    %2 = tpu.bitcast %1 : vector<8x256xf32> -> vector<8x256xi32>
    %c0_i32 = arith.constant 0 : i32
    %3 = vector.broadcast %c0_i32 : i32 to vector<8x256xi32>
    %4 = arith.cmpi sge, %2, %3 : vector<8x256xi32>
    %c2147483647_i32 = arith.constant 2147483647 : i32
    %5 = vector.broadcast %c2147483647_i32 : i32 to vector<8x256xi32>
    %6 = arith.xori %2, %5 : vector<8x256xi32>
    %7 = arith.select %4, %2, %6 : vector<8x256xi1>, vector<8x256xi32>
    %c0_i32_1 = arith.constant 0 : i32
    %8 = vector.broadcast %c0_i32_1 : i32 to vector<8x1xi32>
    %c2147483647_i32_2 = arith.constant 2147483647 : i32
    %9 = vector.broadcast %c2147483647_i32_2 : i32 to vector<8x1xi32>
    %cst = arith.constant 1.000000e+00 : bf16
    %10 = vector.broadcast %cst : bf16 to vector<256x128xbf16>
    %c0_i32_3 = arith.constant 0 : i32
    %c31_i32 = arith.constant 31 : i32
    %11 = arith.addi %c0_i32_3, %c31_i32 : i32
    %c1_i32 = arith.constant 1 : i32
    %12:2 = scf.for %arg3 = %c0_i32_3 to %11 step %c1_i32 iter_args(%arg4 = %8, %arg5 = %9) -> (vector<8x1xi32>, vector<8x1xi32>)  : i32 {
      %19 = arith.xori %arg4, %arg5 : vector<8x1xi32>
      %20 = arith.andi %arg4, %arg5 : vector<8x1xi32>
      %c1_i32_7 = arith.constant 1 : i32
      %21 = vector.broadcast %c1_i32_7 : i32 to vector<8x1xi32>
      %22 = arith.shrsi %19, %21 : vector<8x1xi32>
      %23 = arith.addi %20, %22 : vector<8x1xi32>
      %c1_i32_8 = arith.constant 1 : i32
      %24 = vector.broadcast %c1_i32_8 : i32 to vector<8x1xi32>
      %25 = arith.andi %19, %24 : vector<8x1xi32>
      %26 = arith.addi %23, %25 : vector<8x1xi32>
      %27 = vector.broadcast %26 : vector<8x1xi32> to vector<8x256xi32>
      %28 = arith.cmpi sge, %7, %27 : vector<8x256xi32>
      %29 = arith.extui %28 : vector<8x256xi1> to vector<8x256xi32>
      %30 = arith.sitofp %29 : vector<8x256xi32> to vector<8x256xf32>
      %31 = arith.truncf %30 : vector<8x256xf32> to vector<8x256xbf16>
      %cst_9 = arith.constant dense<0.000000e+00> : vector<8x128xf32>
      %32 = tpu.matmul %31, %10, %cst_9 {dimension_numbers = #tpu.dot_dimension_numbers<[1], [0], [0], [1], [0, 0, 1, 1], [], []>} : vector<8x256xbf16>, vector<256x128xbf16>, vector<8x128xf32> -> vector<8x128xf32>
      %33 = vector.extract_strided_slice %32 {offsets = [0, 0], sizes = [8, 1], strides = [1, 1]} : vector<8x128xf32> to vector<8x1xf32>
      %cst_10 = arith.constant 2.500000e+01 : f32
      %34 = vector.broadcast %cst_10 : f32 to vector<8x1xf32>
      %35 = arith.cmpf oge, %33, %34 : vector<8x1xf32>
      %36 = arith.select %35, %26, %arg4 : vector<8x1xi1>, vector<8x1xi32>
      %c1_i32_11 = arith.constant 1 : i32
      %37 = vector.broadcast %c1_i32_11 : i32 to vector<8x1xi32>
      %38 = arith.subi %26, %37 : vector<8x1xi32>
      %39 = arith.select %35, %arg5, %38 : vector<8x1xi1>, vector<8x1xi32>
      scf.yield %36, %39 : vector<8x1xi32>, vector<8x1xi32>
    }
    %13 = vector.broadcast %12#0 : vector<8x1xi32> to vector<8x256xi32>
    %14 = arith.cmpi sge, %7, %13 : vector<8x256xi32>
    %c0_i32_4 = arith.constant 0 : i32
    %15 = arith.sitofp %c0_i32_4 : i32 to f32
    %16 = vector.broadcast %15 : f32 to vector<8x256xf32>
    %17 = arith.select %14, %0, %16 : vector<8x256xi1>, vector<8x256xf32>
    %c0_5 = arith.constant 0 : index
    %c0_6 = arith.constant 0 : index
    %18 = vector.load %arg2[%c0_5, %c0_6] : memref<8x256xf32, #tpu.memory_space<vmem>>, vector<8x256xf32>
    tpu.vector_store %arg2[%c0_5, %c0_6], %17 {strides = array<i32>} : memref<8x256xf32, #tpu.memory_space<vmem>>, vector<8x256xf32>,
    return
  }
  func.func @transform_0(%arg0: i32) -> (i32, i32) {
    %c0_i32 = arith.constant 0 : i32
    %c0_i32_0 = arith.constant 0 : i32
    return %arg0, %c0_i32 : i32, i32
  }
  func.func @transform_1(%arg0: i32) -> (i32, i32) {
    %c0_i32 = arith.constant 0 : i32
    %c0_i32_0 = arith.constant 0 : i32
    return %arg0, %c0_i32 : i32, i32
  }
}

</mosaic_0001>

<llo_original>
// kernel: tpu_custom_call.1
$region0: #{tpu_custom_call.1}
  #allocation0 [shape = 'u32[]', space=smem, size = 0x4, offset = 0x4, fixed_abs, tag = 'smem constant byte address 0x4 - core index']
  #allocation1 [shape = 'u32[144,128]{1,0:T(1,128)}', space=vmem, size = 0x12000, scoped, tag = 'internal scratch']
  %s0 = inlined_call_operand.hbm [shape: f32[8,256], index: 0, kind: input, shape index: {}]
  %s1 = inlined_call_operand.hbm [shape: f32[8,256], index: 1, kind: output, shape index: {}]
  %s2 = sld [smem:[#allocation0]]
  $region25: #{tpu_custom_call.1} parent=0
    _
  %s4 = ssub.s32 1, %s2
  %s5 = scalar_select 0, %s4, %s2
  $region1: #{tpu_custom_call.1} parent=0
    #allocation2 [shape = 'u8[8192]{0}', space=vmem, size = 0x2000, scoped, tag = 'input window, operand 0, single buffered']
    #allocation3 [shape = 's32[1]{0}', space=sflag, size = 0x4, scoped, tag = 'scoped memory for tpu_custom_call.1']
    #allocation4 [shape = 's32[1]{0}', space=sflag, size = 0x4, scoped, tag = 'scoped memory for tpu_custom_call.1']
    #allocation5 [shape = 'u8[8192]{0}', space=vmem, size = 0x2000, scoped, tag = 'output window, operand 0, single buffered']
    %6 = vsyncpa [#allocation3], 0
    %7 = vsyncpa [#allocation4], 0
    // Predicated region
    $region2: #{tpu_custom_call.1} parent=1 // pred_check
      _
    $region3: #{tpu_custom_call.1} parent=1 // pred_check_branch
      %9 = sbr.rel (0) target = $region5
    $region4: #{tpu_custom_call.1} parent=1 // pred_region
      %s11 = ssub.s32 256, 256
      %12 = vsyncadd [#allocation3], %s11
      %s14 = sshll.u32 [#allocation2], 4
      %s15 = int_to_ptr.vmem [resolvable:$true] %s14
      %17 = dma.hbm_to_vmem [thread:$0]  %s0, 256, %s15, [#allocation3]
    $region5: #{tpu_custom_call.1} parent=1 // pred_fallthru
      _
    // Predicated region
    $region6: #{tpu_custom_call.1} parent=1 // pred_check
      _
    $region7: #{tpu_custom_call.1} parent=1 // pred_check_branch
      %19 = sbr.rel (0) target = $region9
    $region8: #{tpu_custom_call.1} parent=1 // pred_region
      %20 = dma.done [#allocation3], 256
    $region9: #{tpu_custom_call.1} parent=1 // pred_fallthru
      _
    %v23 = vld [vmem:[#allocation2] sm:$0xff]
    %v24 = vld [vmem:[#allocation2 + $0x8] sm:$0xff]
    %v25 = vand.u32 2147483647, %v23
    %v26 = vand.u32 2147483647, %v24
    %vm29 = vcmp.ge.s32.totalorder %v25, 0
    %vm30 = vcmp.ge.s32.totalorder %v26, 0
    %v31 = vxor.u32 %v25, 2147483647
    %v32 = vxor.u32 %v26, 2147483647
    %v33 = vsel %vm29, %v25, %v31
    %v34 = vsel %vm30, %v26, %v32
    loop: start=0, step=1, limit=31
    $region10: #{tpu_custom_call.1} parent=1 // loop_pre_header
      _
    $region11: #{tpu_custom_call.1} parent=1 // loop_header
      %s36 = sphi 0, %s40
      %p37 = scmp.ge.s32.totalorder %s36, 31
      %v41 = vphi 0, %v101
      %v42 = vphi 2147483647, %v103
    $region12: #{tpu_custom_call.1} parent=1 // loop_header_branch
      %39 = sbr.rel (%p37) target = $region16
    $region13: #{tpu_custom_call.1} parent=1 // loop_body
      %v43 = vxor.u32 %v41, %v42
      %v44 = vand.u32 %v41, %v42
      %v45 = vshra.s32 %v43, 1
      %v46 = vadd.s32 %v44, %v45
      %v47 = vand.u32 %v43, 1
      %v48 = vadd.s32 %v46, %v47
      %49 = vset.pattern.permute.xlu0 0
      %50 = vperm.xlu0 %49, %v48
      %v51 = vpop.permute.xlu0 %50
      %vm52 = vcmp.ge.s32.totalorder %v33, %v51
      %vm53 = vcmp.ge.s32.totalorder %v34, %v51
      %v54 = vsel %vm52, 1, 0
      %v55 = vsel %vm53, 1, 0
      %v56 = vcvt.s32.f32 %v54
      %v57 = vcvt.s32.f32 %v55
      %v58 = vpack.c.bf16 %v56, %v56
      %v59 = vpack.c.bf16 %v57, %v57
      %60 = vmatprep.subr.bf16.mxu0 0
      %61 = vmatpush1.bf16.msra.mxu0 1065369472
      %62 = vmatprep.subr.bf16.mxu0 0
      %63 = vmatpush1.bf16.msra.mxu0 1065369472
      %64 = vmatprep.subr.bf16.mxu0 0
      %65 = vmatpush1.bf16.msra.mxu0 1065369472
      %66 = vmatprep.subr.bf16.mxu0 0
      %67 = vmatpush1.bf16.msra.mxu0 1065369472
      %68 = vmatprep.subr.bf16.mxu0 0
      %69 = vmatpush1.bf16.msra.mxu0 1065369472
      %70 = vmatprep.subr.bf16.mxu0 0
      %71 = vmatpush1.bf16.msra.mxu0 1065369472
      %72 = vmatprep.subr.bf16.mxu0 0
      %73 = vmatpush1.bf16.msra.mxu0 1065369472
      %74 = vmatprep.subr.bf16.mxu0 0
      %75 = vmatpush1.bf16.msra.mxu0 1065369472
      %76 = vmatprep.subr.bf16.mxu0 0
      %77 = vmatpush1.bf16.msra.mxu0 1065369472
      %78 = vmatprep.subr.bf16.mxu0 0
      %79 = vmatpush1.bf16.msra.mxu0 1065369472
      %80 = vmatprep.subr.bf16.mxu0 0
      %81 = vmatpush1.bf16.msra.mxu0 1065369472
      %82 = vmatprep.subr.bf16.mxu0 0
      %83 = vmatpush1.bf16.msra.mxu0 1065369472
      %84 = vmatprep.subr.bf16.mxu0 0
      %85 = vmatpush1.bf16.msra.mxu0 1065369472
      %86 = vmatprep.subr.bf16.mxu0 0
      %87 = vmatpush1.bf16.msra.mxu0 1065369472
      %88 = vmatprep.subr.bf16.mxu0 0
      %89 = vmatpush1.bf16.msra.mxu0 1065369472
      %90 = vmatprep.subr.bf16.mxu0 0
      %91 = vmatpush1.bf16.msra.mxu0 1065369472
      %92 = vmatprep.mubr.bf16.mxu0 %v59
      %93 = vmatmul.mubr.bf16.gmra.mrb[0].mxu0 %v58
      %v94 = vpop.f32.mrb[0].mxu0
      %v95 = vadd.f32 0.0, %v94
      %v96 = vpop.f32.mrb[0].mxu0
      %v97 = vpop.f32.mrb[0].mxu0
      %v98 = vpop.f32.mrb[0].mxu0
      %99 = vdwg.mxu0
      %vm100 = vcmp.ge.f32.partialorder %v95, 25.0
      %v101 = vsel %vm100, %v48, %v41
      %v102 = vsub.s32 %v48, 1
      %v103 = vsel %vm100, %v42, %v102
    $region14: #{tpu_custom_call.1} parent=1 // loop_footer
      %s40 = sadd.s32 1, %s36
    $region15: #{tpu_custom_call.1} parent=1 // loop_footer_branch
      %35 = sbr.rel target = $region11
    $region16: #{tpu_custom_call.1} parent=1 // loop_exit
      _
    %104 = vset.pattern.permute.xlu0 0
    %105 = vperm.xlu0 %104, %v41
    %v106 = vpop.permute.xlu0 %105
    %vm107 = vcmp.ge.s32.totalorder %v33, %v106
    %vm108 = vcmp.ge.s32.totalorder %v34, %v106
    %v109 = vsel %vm107, %v23, 0.0
    %v110 = vsel %vm108, %v24, 0.0
    %111 = vst [vmem:[#allocation5] sm:$0xff] %v109
    %112 = vst [vmem:[#allocation5 + $0x8] sm:$0xff] %v110
    // Predicated region
    $region17: #{tpu_custom_call.1} parent=1 // pred_check
      _
    $region18: #{tpu_custom_call.1} parent=1 // pred_check_branch
      %114 = sbr.rel (0) target = $region20
    $region19: #{tpu_custom_call.1} parent=1 // pred_region
      %s116 = ssub.s32 256, 256
      %117 = vsyncadd [#allocation4], %s116
      %s119 = sshll.u32 [#allocation5], 4
      %s120 = int_to_ptr.vmem [resolvable:$true] %s119
      %122 = dma.vmem_to_hbm [thread:$0]  %s120, 256, %s1, [#allocation4]
    $region20: #{tpu_custom_call.1} parent=1 // pred_fallthru
      _
    // Predicated region
    $region21: #{tpu_custom_call.1} parent=1 // pred_check
      _
    $region22: #{tpu_custom_call.1} parent=1 // pred_check_branch
      %124 = sbr.rel (0) target = $region24
    $region23: #{tpu_custom_call.1} parent=1 // pred_region
      %125 = dma.done [#allocation4], 256
    $region24: #{tpu_custom_call.1} parent=1 // pred_fallthru
      _
    %126 = vsyncpa [#allocation3], 1
    %127 = vsyncpa [#allocation4], 1

</llo_original>
